<compile_context>
chip_gen: v7x
topology: tpu7x:2x2x1
jax: 0.10.0
libtpu: 0.0.40
codegen_flags: <defaults>
</compile_context>

<pallas_src>
import jax
import jax.numpy as jnp
from jax.experimental import pallas as pl
from jax.experimental.pallas import tpu as pltpu


def _round_up(x, m):
    return (x + m - 1) // m * m


def _vmem_capacity_bytes():
    try:
        info = pltpu.get_tpu_info()
        cap = getattr(info, "vmem_capacity_bytes", None)
        if cap:
            return int(cap)
    except Exception:
        pass
    return 64 * 1024 * 1024  # conservative default (v7x per-TensorCore VMEM)


def _device_kind():
    try:
        return jax.devices()[0].device_kind.lower()
    except Exception:
        return ""


# ----------------------------------------------------------------------------------
# LayerNorm (Decoder.norm)
# ----------------------------------------------------------------------------------
def _make_layernorm_kernel(eps):
    def kernel(x_ref, g_ref, b_ref, o_ref):
        x = x_ref[...].astype(jnp.float32)
        mu = jnp.mean(x, axis=-1, keepdims=True)
        xc = x - mu
        var = jnp.mean(xc * xc, axis=-1, keepdims=True)
        y = xc * jax.lax.rsqrt(var + eps)
        o_ref[...] = (y * g_ref[...] + b_ref[...]).astype(o_ref.dtype)
    return kernel


def decoder_norm_forward(x, gamma, beta, *, eps=1e-5, tm=256):
    """nn.LayerNorm(d_model) over the last dim of x (the concrete part of Decoder.forward)."""
    lead = x.shape[:-1]
    d = x.shape[-1]
    x2 = x.reshape(-1, d)
    n = x2.shape[0]

    tm = max(8, min(tm, _round_up(n, 8)))
    n_pad = _round_up(n, tm)
    if n_pad != n:
        x2 = jnp.zeros((n_pad, d), x2.dtype).at[:n].set(x2)
    g2 = gamma.reshape(1, d).astype(jnp.float32)
    b2 = beta.reshape(1, d).astype(jnp.float32)

    out = pl.pallas_call(
        _make_layernorm_kernel(eps),
        out_shape=jax.ShapeDtypeStruct((n_pad, d), x.dtype),
        grid_spec=pltpu.PrefetchScalarGridSpec(
            num_scalar_prefetch=0,
            grid=(n_pad // tm,),
            in_specs=[
                pl.BlockSpec((tm, d), lambda i: (i, 0)),
                pl.BlockSpec((1, d), lambda i: (0, 0)),
                pl.BlockSpec((1, d), lambda i: (0, 0)),
            ],
            out_specs=pl.BlockSpec((tm, d), lambda i: (i, 0)),
        ),
        compiler_params=pltpu.CompilerParams(dimension_semantics=("parallel",)),
    )(x2, g2, b2)

    if n_pad != n:
        out = out[:n]
    return out.reshape(*lead, d)


# ----------------------------------------------------------------------------------
# Generator head: log_softmax(x @ W + b) with streamed vocab stripes + online LSE
# ----------------------------------------------------------------------------------
def _make_generator_kernel(nv_tiles, tnv, tm):
    """nv_tiles/tnv/tm are Python ints; stripe slices stay static (no dynamic lane slicing)."""

    def kernel(x_ref, w_ref, b_ref, o_ref, m_ref, l_ref):
        # x_ref: (tm, d_model) bf16; w_ref: (d_model, tnv) bf16; b_ref: (1, tnv) f32
        # o_ref: (tm, vocab_pad) resident across j; m_ref/l_ref: (tm, 1) f32 scratch.
        j = pl.program_id(1)

        @pl.when(j == 0)
        def _init():
            m_ref[...] = jnp.full((tm, 1), -jnp.inf, jnp.float32)
            l_ref[...] = jnp.zeros((tm, 1), jnp.float32)

        # Partial logits for this vocab stripe (f32 MXU accumulation).
        part = jnp.dot(x_ref[...], w_ref[...],
                       preferred_element_type=jnp.float32) + b_ref[...]

        # Online (flash-style) log-sum-exp update -- hidden under the weight DMA.
        m_prev = m_ref[...]
        m_new = jnp.maximum(m_prev, jnp.max(part, axis=-1, keepdims=True))
        l_ref[...] = (l_ref[...] * jnp.exp(m_prev - m_new)
                      + jnp.sum(jnp.exp(part - m_new), axis=-1, keepdims=True))
        m_ref[...] = m_new

        # Stage raw (biased) logits of stripes 0..nv_tiles-2 straight into the resident
        # output block.  Static dispatch over the stripe index keeps all slices static
        # (exactly one branch executes per grid step) -- no big logits scratch needed.
        if nv_tiles > 1:
            part_cast = part.astype(o_ref.dtype)
            for t in range(nv_tiles - 1):
                @pl.when(j == t)
                def _store(t=t):
                    o_ref[:, t * tnv:(t + 1) * tnv] = part_cast

        # Last vocab stripe: finish log_softmax in place with one subtract/store pass.
        @pl.when(j == nv_tiles - 1)
        def _finalize():
            corr = m_ref[...] + jnp.log(l_ref[...])
            # The last stripe never round-trips through the output block (f32 path).
            o_ref[:, (nv_tiles - 1) * tnv:nv_tiles * tnv] = (part - corr).astype(o_ref.dtype)
            # Earlier stripes: re-read the staged logits and subtract in place.
            # TODO(synk): lax.fori_loop once dynamic lane-dim slices are safe.
            for t in range(nv_tiles - 1):
                sl = slice(t * tnv, (t + 1) * tnv)
                o_ref[:, sl] = (o_ref[:, sl].astype(jnp.float32) - corr).astype(o_ref.dtype)

    return kernel


def prepare_generator_params(weight_t, bias, *, tnv=2048):
    """Cast/pad the projection once (do this OUTSIDE the training step and cache it).

    weight_t: (d_model, vocab) -- nn.Linear weight transposed.  bias: (vocab,).
    Returns (w_bf16_padded, bias_f32_padded, vocab, tnv).
    """
    d_model, vocab = weight_t.shape
    tnv = max(128, min(_round_up(tnv, 128), _round_up(vocab, 128)))
    if vocab % 128 == 0:
        # Pick tnv as a divisor of vocab so vocab_pad == vocab and the post-kernel
        # slice is a no-op (no extra N*V HBM copy).
        while vocab % tnv != 0:
            tnv -= 128
    vocab_pad = _round_up(vocab, tnv)

    if vocab_pad == vocab:
        w_p = weight_t.astype(jnp.bfloat16)
        b_p = bias.astype(jnp.float32).reshape(1, vocab)
    else:
        w_p = jnp.zeros((d_model, vocab_pad), jnp.bfloat16).at[:, :vocab].set(
            weight_t.astype(jnp.bfloat16))
        # Padded vocab columns get a huge negative bias: zero softmax contribution.
        b_p = jnp.full((1, vocab_pad), -1e30, jnp.float32).at[0, :vocab].set(
            bias.astype(jnp.float32))
    return (w_p, b_p, vocab, tnv)


def generator_forward_prepared(x, params, *, tm=None, out_dtype=None):
    """log_softmax(x @ W + b) over vocab, using pre-cast/pre-padded params.

    Pass out_dtype=jnp.bfloat16 for training: halves the (N, vocab) HBM writeback and
    the resident VMEM output block (running max/sum/corr stay f32 regardless).
    """
    w_p, b_p, vocab, tnv = params
    d_model, vocab_pad = w_p.shape
    nv_tiles = vocab_pad // tnv
    lead = x.shape[:-1]
    if out_dtype is None:
        out_dtype = x.dtype
    out_bytes = jnp.dtype(out_dtype).itemsize

    x2 = x.reshape(-1, d_model).astype(jnp.bfloat16)
    n = x2.shape[0]

    cap = _vmem_capacity_bytes()
    # Leave headroom below physical VMEM; never a blind 64 MiB cap.
    budget = max(min(cap - (16 << 20), 100 << 20), 16 << 20)

    if tm is None:
        kind = _device_kind()
        if "v5 lite" in kind or "v5e" in kind:
            tm = 256          # v5e is already near roofline balance at 256
        elif cap <= 64 * 1024 * 1024:
            tm = 256          # v7x: 64 MiB/TC; budget loop below may shrink further
        else:
            tm = 512          # v6e: halves per-token weight re-reads vs tm=256

    # Clamp for small N; keep >=2 row blocks so both v7x TensorCores get work.
    tm = max(8, min(tm, _round_up(n, 8)))
    if _round_up(n, tm) // tm < 2 and n > 8:
        tm = max(8, _round_up((n + 1) // 2, 8))

    def _vmem_needed(tm_):
        return (2 * tm_ * d_model * 2            # x tile (bf16), double-buffered
                + 2 * d_model * tnv * 2          # weight stripe (bf16), double-buffered
                + 2 * tnv * 4                    # bias stripe, double-buffered
                + 2 * tm_ * vocab_pad * out_bytes  # resident output block, double-buffered
                + 2 * tm_ * 4 * 2                # m/l running stats
                + 3 * tm_ * tnv * 4)             # in-flight f32 stripe + temporaries

    while tm > 8 and _vmem_needed(tm) > budget:
        tm = max(8, (tm // 2 + 7) // 8 * 8)

    n_pad = _round_up(n, tm)
    if n_pad != n:
        x2 = jnp.zeros((n_pad, d_model), jnp.bfloat16).at[:n].set(x2)

    grid = (n_pad // tm, nv_tiles)
    kernel = _make_generator_kernel(nv_tiles, tnv, tm)

    out = pl.pallas_call(
        kernel,
        out_shape=jax.ShapeDtypeStruct((n_pad, vocab_pad), out_dtype),
        grid_spec=pltpu.PrefetchScalarGridSpec(
            num_scalar_prefetch=0,
            grid=grid,
            in_specs=[
                pl.BlockSpec((tm, d_model), lambda i, j: (i, 0)),   # x rows (reused over j)
                pl.BlockSpec((d_model, tnv), lambda i, j: (0, j)),  # streamed weight stripes
                pl.BlockSpec((1, tnv), lambda i, j: (0, j)),        # bias stripes
            ],
            out_specs=pl.BlockSpec((tm, vocab_pad), lambda i, j: (i, 0)),  # resident over j
            scratch_shapes=[pltpu.VMEM((tm, 1), jnp.float32),   # running max
                            pltpu.VMEM((tm, 1), jnp.float32)],  # running sum
        ),
        compiler_params=pltpu.CompilerParams(
            dimension_semantics=("parallel", "arbitrary"),
            vmem_limit_bytes=int(budget),
        ),
    )(x2, w_p, b_p)

    if n_pad != n or vocab_pad != vocab:
        out = out[:n, :vocab]
    return out.reshape(*lead, vocab)


def generator_forward(x, weight_t, bias, *, tm=None, tnv=2048, out_dtype=None):
    """Convenience wrapper (casts/pads the weight per call; prefer the prepared path)."""
    params = prepare_generator_params(weight_t, bias, tnv=tnv)
    return generator_forward_prepared(x, params, tm=tm, out_dtype=out_dtype)


if __name__ == "__main__":
    # Small shapes consistent with the module: (batch=2, seq=8, d_model=32), vocab=128.
    batch, seq, d_model, vocab = 2, 8, 32, 128

    key = jax.random.PRNGKey(0)
    kx, kw, kb, kg, kbe = jax.random.split(key, 5)

    x = jax.random.normal(kx, (batch, seq, d_model), dtype=jnp.float32)

    # Decoder.norm params (PyTorch LayerNorm-style affine).
    gamma = 1.0 + 0.1 * jax.random.normal(kg, (d_model,), dtype=jnp.float32)
    beta = 0.1 * jax.random.normal(kbe, (d_model,), dtype=jnp.float32)

    # Generator ("Linear d_model->vocab") params, PyTorch-like scale 1/sqrt(d_model).
    scale = 1.0 / (d_model ** 0.5)
    weight = jax.random.uniform(kw, (vocab, d_model), jnp.float32, -scale, scale)
    bias = jax.random.uniform(kb, (vocab,), jnp.float32, -scale, scale)
    weight_t = weight.T  # (d_model, vocab)

    # --- Pallas: Decoder.norm (the N cloned layers are abstract in the spec) ---
    x_norm = decoder_norm_forward(x, gamma, beta)
    x_norm = jax.block_until_ready(x_norm)

    mu = jnp.mean(x, axis=-1, keepdims=True)
    var = jnp.mean((x - mu) ** 2, axis=-1, keepdims=True)
    ref_norm = (x - mu) * jax.lax.rsqrt(var + 1e-5) * gamma + beta
    assert x_norm.shape == x.shape
    assert jnp.allclose(x_norm, ref_norm, atol=1e-4, rtol=1e-4), "LayerNorm mismatch"

    # --- Pallas: generator head (prepare params once, then run) ---
    params = prepare_generator_params(weight_t, bias, tnv=2048)
    out = generator_forward_prepared(x_norm, params)
    out = jax.block_until_ready(out)

    logits_ref = jnp.dot(x_norm.astype(jnp.bfloat16), weight_t.astype(jnp.bfloat16),
                         preferred_element_type=jnp.float32) + bias
    ref = jax.nn.log_softmax(logits_ref, axis=-1)

    assert out.shape == (batch, seq, vocab)
    assert jnp.allclose(out, ref, atol=1e-4, rtol=1e-4), "log_softmax head mismatch"

    print("KERNEL_OK")
</pallas_src>

<mosaic_0001>
module attributes {stable_mosaic.version = 11 : i64} {
  func.func @kernel(%arg0: i32, %arg1: memref<16x32xf32, #tpu.memory_space<vmem>>, %arg2: memref<1x32xf32, #tpu.memory_space<vmem>>, %arg3: memref<1x32xf32, #tpu.memory_space<vmem>>, %arg4: memref<16x32xf32, #tpu.memory_space<vmem>>) attributes {dimension_semantics = [#tpu.dimension_semantics<parallel>], iteration_bounds = array<i64: 1>, scalar_prefetch = 0 : i64, scratch_operands = 0 : i64, tpu.core_type = #tpu.core_type<tc>, window_params = [{transform_indices = @transform_0, window_bounds = array<i64: 16, 32>}, {pipeline_mode = #tpu.pipeline_mode<synchronous>, transform_indices = @transform_1, window_bounds = array<i64: 1, 32>}, {pipeline_mode = #tpu.pipeline_mode<synchronous>, transform_indices = @transform_2, window_bounds = array<i64: 1, 32>}, {transform_indices = @transform_3, window_bounds = array<i64: 16, 32>}]} {
    %c0 = arith.constant 0 : index
    %c0_0 = arith.constant 0 : index
    %0 = vector.load %arg1[%c0, %c0_0] : memref<16x32xf32, #tpu.memory_space<vmem>>, vector<16x32xf32>
    %cst = arith.constant dense<0.000000e+00> : vector<16xf32>
    %1 = vector.multi_reduction <add>, %0, %cst [1] : vector<16x32xf32> to vector<16xf32>
    %2 = vector.shape_cast %1 : vector<16xf32> to vector<16x1xf32>
    %cst_1 = arith.constant 3.200000e+01 : f32
    %3 = vector.broadcast %cst_1 : f32 to vector<16x1xf32>
    %4 = arith.divf %2, %3 : vector<16x1xf32>
    %5 = vector.broadcast %4 : vector<16x1xf32> to vector<16x32xf32>
    %6 = arith.subf %0, %5 : vector<16x32xf32>
    %7 = arith.mulf %6, %6 : vector<16x32xf32>
    %cst_2 = arith.constant dense<0.000000e+00> : vector<16xf32>
    %8 = vector.multi_reduction <add>, %7, %cst_2 [1] : vector<16x32xf32> to vector<16xf32>
    %9 = vector.shape_cast %8 : vector<16xf32> to vector<16x1xf32>
    %cst_3 = arith.constant 3.200000e+01 : f32
    %10 = vector.broadcast %cst_3 : f32 to vector<16x1xf32>
    %11 = arith.divf %9, %10 : vector<16x1xf32>
    %cst_4 = arith.constant 9.99999974E-6 : f32
    %12 = vector.broadcast %cst_4 : f32 to vector<16x1xf32>
    %13 = arith.addf %11, %12 : vector<16x1xf32>
    %14 = math.rsqrt %13 : vector<16x1xf32>
    %15 = vector.broadcast %14 : vector<16x1xf32> to vector<16x32xf32>
    %16 = arith.mulf %6, %15 : vector<16x32xf32>
    %c0_5 = arith.constant 0 : index
    %c0_6 = arith.constant 0 : index
    %17 = vector.load %arg2[%c0_5, %c0_6] : memref<1x32xf32, #tpu.memory_space<vmem>>, vector<1x32xf32>
    %18 = vector.broadcast %17 : vector<1x32xf32> to vector<16x32xf32>
    %19 = arith.mulf %16, %18 : vector<16x32xf32>
    %c0_7 = arith.constant 0 : index
    %c0_8 = arith.constant 0 : index
    %20 = vector.load %arg3[%c0_7, %c0_8] : memref<1x32xf32, #tpu.memory_space<vmem>>, vector<1x32xf32>
    %21 = vector.broadcast %20 : vector<1x32xf32> to vector<16x32xf32>
    %22 = arith.addf %19, %21 : vector<16x32xf32>
    %c0_9 = arith.constant 0 : index
    %c0_10 = arith.constant 0 : index
    %23 = vector.load %arg4[%c0_9, %c0_10] : memref<16x32xf32, #tpu.memory_space<vmem>>, vector<16x32xf32>
    tpu.vector_store %arg4[%c0_9, %c0_10], %22 {strides = array<i32>} : memref<16x32xf32, #tpu.memory_space<vmem>>, vector<16x32xf32>,
    return
  }
  func.func @transform_0(%arg0: i32) -> (i32, i32) {
    %c0_i32 = arith.constant 0 : i32
    %c0_i32_0 = arith.constant 0 : i32
    return %arg0, %c0_i32 : i32, i32
  }
  func.func @transform_1(%arg0: i32) -> (i32, i32) {
    %c0_i32 = arith.constant 0 : i32
    %c0_i32_0 = arith.constant 0 : i32
    %c0_i32_1 = arith.constant 0 : i32
    return %c0_i32, %c0_i32_0 : i32, i32
  }
  func.func @transform_2(%arg0: i32) -> (i32, i32) {
    %c0_i32 = arith.constant 0 : i32
    %c0_i32_0 = arith.constant 0 : i32
    %c0_i32_1 = arith.constant 0 : i32
    return %c0_i32, %c0_i32_0 : i32, i32
  }
  func.func @transform_3(%arg0: i32) -> (i32, i32) {
    %c0_i32 = arith.constant 0 : i32
    %c0_i32_0 = arith.constant 0 : i32
    return %arg0, %c0_i32 : i32, i32
  }
}

</mosaic_0001>

<llo_original>
// kernel: tpu_custom_call.1
$region0: #{tpu_custom_call.1}
  #allocation0 [shape = 'u32[]', space=smem, size = 0x4, offset = 0x4, fixed_abs, tag = 'smem constant byte address 0x4 - core index']
  #allocation1 [shape = 'u32[144,128]{1,0:T(1,128)}', space=vmem, size = 0x12000, scoped, tag = 'internal scratch']
  %s0 = inlined_call_operand.hbm [shape: f32[16,32], index: 0, kind: input, shape index: {}]
  %s1 = inlined_call_operand.vmem [shape: f32[1,32], index: 1, kind: input, shape index: {}]
  %s2 = inlined_call_operand.vmem [shape: f32[1,32], index: 2, kind: input, shape index: {}]
  %s3 = inlined_call_operand.hbm [shape: f32[16,32], index: 3, kind: output, shape index: {}]
  %s4 = sld [smem:[#allocation0]]
  $region26: #{tpu_custom_call.1} parent=0
    _
  %s6 = ssub.s32 1, %s4
  %s7 = scalar_select 0, %s6, %s4
  $region1: #{tpu_custom_call.1} parent=0
    #allocation2 [shape = 'u8[8192]{0}', space=vmem, size = 0x2000, scoped, tag = 'input window, operand 0, single buffered']
    #allocation3 [shape = 's32[1]{0}', space=sflag, size = 0x4, scoped, tag = 'scoped memory for tpu_custom_call.1']
    #allocation4 [shape = 's32[1]{0}', space=sflag, size = 0x4, scoped, tag = 'scoped memory for tpu_custom_call.1']
    #allocation5 [shape = 'u8[8192]{0}', space=vmem, size = 0x2000, scoped, tag = 'output window, operand 0, single buffered']
    %8 = vsyncpa [#allocation3], 0
    %9 = vsyncpa [#allocation4], 0
    // Predicated region
    $region2: #{tpu_custom_call.1} parent=1 // pred_check
      _
    $region3: #{tpu_custom_call.1} parent=1 // pred_check_branch
      %11 = sbr.rel (0) target = $region5
    $region4: #{tpu_custom_call.1} parent=1 // pred_region
      %s13 = ssub.s32 256, 256
      %14 = vsyncadd [#allocation3], %s13
      %s15 = sshll.u32 [#allocation2], 4
      %s16 = int_to_ptr.vmem [resolvable:$true] %s15
      %21 = dma.hbm_to_vmem [thread:$0]  %s0, 256, %s16, [#allocation3], 128, 128, 8
    $region5: #{tpu_custom_call.1} parent=1 // pred_fallthru
      _
    // Predicated region
    $region6: #{tpu_custom_call.1} parent=1 // pred_check
      _
    $region7: #{tpu_custom_call.1} parent=1 // pred_check_branch
      %23 = sbr.rel (0) target = $region9
    $region8: #{tpu_custom_call.1} parent=1 // pred_region
      _
    $region9: #{tpu_custom_call.1} parent=1 // pred_fallthru
      _
    // Predicated region
    $region10: #{tpu_custom_call.1} parent=1 // pred_check
      _
    $region11: #{tpu_custom_call.1} parent=1 // pred_check_branch
      %25 = sbr.rel (0) target = $region13
    $region12: #{tpu_custom_call.1} parent=1 // pred_region
      _
    $region13: #{tpu_custom_call.1} parent=1 // pred_fallthru
      _
    // Predicated region
    $region14: #{tpu_custom_call.1} parent=1 // pred_check
      _
    $region15: #{tpu_custom_call.1} parent=1 // pred_check_branch
      %27 = sbr.rel (0) target = $region17
    $region16: #{tpu_custom_call.1} parent=1 // pred_region
      %28 = dma.done [#allocation3], 256
    $region17: #{tpu_custom_call.1} parent=1 // pred_fallthru
      _
    %v29 = vld [vmem:[#allocation2] sm:$0xff]
    %v30 = vld [vmem:[#allocation2 + $0x8] sm:$0xff]
    %vm31 = vcmask 261120
    %v32 = vsel %vm31, %v29, 0.0
    %33 = vadd.xlane.f32.xlu0 %v32
    %v34 = vpop.xlane.xlu0 %33
    %v35 = vsel %vm31, %v30, 0.0
    %36 = vadd.xlane.f32.xlu0 %v35
    %v37 = vpop.xlane.xlu0 %36
    %v38 = vrcp.pop 32.0
    %v39 = vmul.f32 %v34, %v38
    %v40 = vmul.f32 %v37, %v38
    %v41 = vsub.f32 %v29, %v39
    %v42 = vsub.f32 %v30, %v40
    %v43 = vmul.f32 %v41, %v41
    %v44 = vmul.f32 %v42, %v42
    %v45 = vsel %vm31, %v43, 0.0
    %46 = vadd.xlane.f32.xlu0 %v45
    %v47 = vpop.xlane.xlu0 %46
    %v48 = vsel %vm31, %v44, 0.0
    %49 = vadd.xlane.f32.xlu0 %v48
    %v50 = vpop.xlane.xlu0 %49
    %v51 = vmul.f32 %v47, %v38
    %v52 = vmul.f32 %v50, %v38
    %v53 = vadd.f32 %v51, 1e-05
    %v54 = vadd.f32 %v52, 1e-05
    %v55 = vrsqrt.pop %v53
    %v56 = vrsqrt.pop %v54
    %v57 = vmul.f32 %v41, %v55
    %v58 = vmul.f32 %v42, %v56
    %v59 = vld [vmem:[%s1] sm:$0x1]
    %v61 = vlaneseq
    %v62 = vshrl.u32 %v61, 7
    %v63 = vsub.s32 0, %v62
    %v64 = vrot.slane %v59, %v63
    %v66 = vmul.f32 %v57, %v64
    %v67 = vmul.f32 %v58, %v64
    %v68 = vld [vmem:[%s2] sm:$0x1]
    %v70 = vlaneseq
    %v71 = vshrl.u32 %v70, 7
    %v72 = vsub.s32 0, %v71
    %v73 = vrot.slane %v68, %v72
    %v75 = vadd.f32 %v66, %v73
    %v76 = vadd.f32 %v67, %v73
    %77 = vst.msk [vmem:[#allocation5] sm:$0xff] %vm31, %v75
    %78 = vst.msk [vmem:[#allocation5 + $0x8] sm:$0xff] %vm31, %v76
    // Predicated region
    $region18: #{tpu_custom_call.1} parent=1 // pred_check
      _
    $region19: #{tpu_custom_call.1} parent=1 // pred_check_branch
      %80 = sbr.rel (0) target = $region21
    $region20: #{tpu_custom_call.1} parent=1 // pred_region
      %s82 = ssub.s32 256, 256
      %83 = vsyncadd [#allocation4], %s82
      %s84 = sshll.u32 [#allocation5], 4
      %s85 = int_to_ptr.vmem [resolvable:$true] %s84
      %90 = dma.vmem_to_hbm [thread:$0]  %s85, 256, %s3, [#allocation4], 128, 128, 8
    $region21: #{tpu_custom_call.1} parent=1 // pred_fallthru
      _
    // Predicated region
    $region22: #{tpu_custom_call.1} parent=1 // pred_check
      _
    $region23: #{tpu_custom_call.1} parent=1 // pred_check_branch
      %92 = sbr.rel (0) target = $region25
    $region24: #{tpu_custom_call.1} parent=1 // pred_region
      %93 = dma.done [#allocation4], 256
    $region25: #{tpu_custom_call.1} parent=1 // pred_fallthru
      _
    %94 = vsyncpa [#allocation3], 1
    %95 = vsyncpa [#allocation4], 1

</llo_original>
